<compile_context>
chip_gen: v5e
topology: v5e:2x2
jax: 0.10.0
libtpu: 0.0.40
codegen_flags: <defaults>
</compile_context>

<pallas_src>
import jax
import jax.numpy as jnp
from jax.experimental import pallas as pl
from jax.experimental.pallas import tpu as pltpu


def _elementwise_kernel(x_ref, add_ref, sub_ref, mul_ref, div_ref,
                        gt_ref, lt_ref, eq_ref):
    x = x_ref[...]
    add_ref[...] = x + 2.0
    sub_ref[...] = x - 3.0
    mul_ref[...] = x * 4.0
    div_ref[...] = x / 5.0                       # keep explicit divide for bit parity
    # astype is a no-op when the output ref is bool; converts on the int8 fallback.
    gt_ref[...] = (x > 1.0).astype(gt_ref.dtype)
    lt_ref[...] = (x < 2.0).astype(lt_ref.dtype)
    eq_ref[...] = (x == 2.0).astype(eq_ref.dtype)


def _run_pallas(xf, mask_dtype):
    """Run the fused kernel over a lane-dense (rows, lanes) slab."""
    rows, lanes = xf.shape

    # Chip-gated block size: larger blocks on 128-MiB VMEM chips (v5e/v6e),
    # conservative 512K-element blocks on 64-MiB v7x (or if the query fails).
    try:
        vmem_cap = int(getattr(pltpu.get_tpu_info(), "vmem_capacity_bytes",
                               64 << 20))
    except Exception:  # pragma: no cover - hardware query not available
        vmem_cap = 64 << 20
    target_elems = (1024 * 1024) if vmem_cap >= (96 << 20) else (512 * 1024)

    # Row count per block kept a multiple of 32 so f32 and bool/int8 outputs
    # stay tile-aligned; a partial last block is clipped by the pipeline.
    target_rows = max(32, (target_elems // lanes) // 32 * 32)
    block_rows = min(rows, target_rows)
    # Guarantee >=2 grid steps whenever the slab is splittable on 32-row
    # boundaries, so the "parallel" axis can shard across v7x's two TCs.
    if rows >= 64 and pl.cdiv(rows, block_rows) < 2:
        half = pl.cdiv(rows, 2)
        block_rows = min(rows, ((half + 31) // 32) * 32)
    grid = (pl.cdiv(rows, block_rows),)

    # VMEM limit derived from the double-buffered working set:
    # input f32 (4B) + 4 f32 outputs (16B) + 3 mask outputs (3B) per element.
    blk_bytes = block_rows * lanes * (4 + 4 * 4 + 3 * 1)
    vmem_limit = max(32 << 20, min(2 * blk_bytes + (8 << 20), 100 << 20))

    spec = pl.BlockSpec((block_rows, lanes), lambda i: (i, 0))
    f_out = jax.ShapeDtypeStruct(xf.shape, xf.dtype)
    m_out = jax.ShapeDtypeStruct(xf.shape, mask_dtype)

    return pl.pallas_call(
        _elementwise_kernel,
        grid=grid,
        in_specs=[spec],
        out_specs=tuple([spec] * 7),
        out_shape=(f_out, f_out, f_out, f_out, m_out, m_out, m_out),
        compiler_params=pltpu.CompilerParams(
            dimension_semantics=("parallel",),
            vmem_limit_bytes=vmem_limit),
    )(xf)


def pt_module_forward(x):
    """Returns (x+2, x-3, x*4, x/5, x>1, x<2, x==2) exactly as PtModule."""
    orig_shape = x.shape
    n = x.size
    xflat = x.reshape(-1)

    n_main = (n // 128) * 128
    if n_main == 0:
        # Tiny (<128-element) input: pure jnp is cheaper than any kernel launch.
        return (x + 2, x - 3, x * 4, x / 5, x > 1, x < 2, x == 2)

    # Widest lane width (multiple of 128) dividing the main span: keeps stores
    # unmasked / lane-dense and the reshape a pure bitcast.
    lanes = 128
    for cand in (2048, 1024, 512, 256, 128):
        if n_main % cand == 0:
            lanes = cand
            break

    has_tail = (n_main != n)
    main = xflat if not has_tail else xflat[:n_main]
    xf = main.reshape(-1, lanes)

    # Prefer bool mask outputs straight from the kernel; fall back to int8
    # only if this Mosaic build rejects bool stores.
    try:
        outs = _run_pallas(xf, jnp.bool_)
        masks_are_bool = True
    except Exception:
        outs = _run_pallas(xf, jnp.int8)
        masks_are_bool = False

    add, sub, mul, div, gt, lt, eq = outs
    if not masks_are_bool:
        gt = gt.astype(jnp.bool_)
        lt = lt.astype(jnp.bool_)
        eq = eq.astype(jnp.bool_)

    if not has_tail:
        return tuple(a.reshape(orig_shape)
                     for a in (add, sub, mul, div, gt, lt, eq))

    # Rare path (n % 128 != 0): tiny (<128-elem) jnp tail, then concatenate.
    t = xflat[n_main:]
    tails = (t + 2, t - 3, t * 4, t / 5, t > 1, t < 2, t == 2)
    return tuple(jnp.concatenate([a.reshape(-1), b]).reshape(orig_shape)
                 for a, b in zip((add, sub, mul, div, gt, lt, eq), tails))


if __name__ == "__main__":
    key = jax.random.PRNGKey(0)
    x = jax.random.normal(key, (2, 4, 16, 16), dtype=jnp.float32)
    # Exercise the == branch with an exact hit.
    x = x.at[0, 0, 0, 0].set(2.0)

    outs = pt_module_forward(x)
    outs = jax.block_until_ready(outs)

    # Reference check (pure JAX, same semantics as the PyTorch module).
    ref = (x + 2, x - 3, x * 4, x / 5, x > 1, x < 2, x == 2)
    for got, want in zip(outs, ref):
        assert got.shape == want.shape, (got.shape, want.shape)
        assert got.dtype == want.dtype, (got.dtype, want.dtype)
        if got.dtype == jnp.bool_:
            assert bool(jnp.all(got == want))
        else:
            assert bool(jnp.allclose(got, want, atol=1e-6, rtol=1e-6))

    print("KERNEL_OK")
</pallas_src>

<mosaic_0001>
module attributes {stable_mosaic.version = 11 : i64} {
  func.func @_elementwise_kernel(%arg0: i32, %arg1: memref<1x2048xf32, #tpu.memory_space<vmem>>, %arg2: memref<1x2048xf32, #tpu.memory_space<vmem>>, %arg3: memref<1x2048xf32, #tpu.memory_space<vmem>>, %arg4: memref<1x2048xf32, #tpu.memory_space<vmem>>, %arg5: memref<1x2048xf32, #tpu.memory_space<vmem>>, %arg6: memref<1x2048xi32, #tpu.memory_space<vmem>>, %arg7: memref<1x2048xi32, #tpu.memory_space<vmem>>, %arg8: memref<1x2048xi32, #tpu.memory_space<vmem>>) attributes {dimension_semantics = [#tpu.dimension_semantics<parallel>], iteration_bounds = array<i64: 1>, scalar_prefetch = 0 : i64, scratch_operands = 0 : i64, tpu.core_type = #tpu.core_type<tc>, window_params = [{transform_indices = @transform_0, window_bounds = array<i64: 1, 2048>}, {transform_indices = @transform_1, window_bounds = array<i64: 1, 2048>}, {transform_indices = @transform_2, window_bounds = array<i64: 1, 2048>}, {transform_indices = @transform_3, window_bounds = array<i64: 1, 2048>}, {transform_indices = @transform_4, window_bounds = array<i64: 1, 2048>}, {transform_indices = @transform_5, window_bounds = array<i64: 1, 2048>}, {transform_indices = @transform_6, window_bounds = array<i64: 1, 2048>}, {transform_indices = @transform_7, window_bounds = array<i64: 1, 2048>}]} {
    %c0 = arith.constant 0 : index
    %c0_0 = arith.constant 0 : index
    %0 = vector.load %arg1[%c0, %c0_0] : memref<1x2048xf32, #tpu.memory_space<vmem>>, vector<1x2048xf32>
    %cst = arith.constant 2.000000e+00 : f32
    %1 = vector.broadcast %cst : f32 to vector<1x2048xf32>
    %2 = arith.addf %0, %1 : vector<1x2048xf32>
    %c0_1 = arith.constant 0 : index
    %c0_2 = arith.constant 0 : index
    %3 = vector.load %arg2[%c0_1, %c0_2] : memref<1x2048xf32, #tpu.memory_space<vmem>>, vector<1x2048xf32>
    tpu.vector_store %arg2[%c0_1, %c0_2], %2 {strides = array<i32>} : memref<1x2048xf32, #tpu.memory_space<vmem>>, vector<1x2048xf32>,
    %cst_3 = arith.constant 3.000000e+00 : f32
    %4 = vector.broadcast %cst_3 : f32 to vector<1x2048xf32>
    %5 = arith.subf %0, %4 : vector<1x2048xf32>
    %c0_4 = arith.constant 0 : index
    %c0_5 = arith.constant 0 : index
    %6 = vector.load %arg3[%c0_4, %c0_5] : memref<1x2048xf32, #tpu.memory_space<vmem>>, vector<1x2048xf32>
    tpu.vector_store %arg3[%c0_4, %c0_5], %5 {strides = array<i32>} : memref<1x2048xf32, #tpu.memory_space<vmem>>, vector<1x2048xf32>,
    %cst_6 = arith.constant 4.000000e+00 : f32
    %7 = vector.broadcast %cst_6 : f32 to vector<1x2048xf32>
    %8 = arith.mulf %0, %7 : vector<1x2048xf32>
    %c0_7 = arith.constant 0 : index
    %c0_8 = arith.constant 0 : index
    %9 = vector.load %arg4[%c0_7, %c0_8] : memref<1x2048xf32, #tpu.memory_space<vmem>>, vector<1x2048xf32>
    tpu.vector_store %arg4[%c0_7, %c0_8], %8 {strides = array<i32>} : memref<1x2048xf32, #tpu.memory_space<vmem>>, vector<1x2048xf32>,
    %cst_9 = arith.constant 5.000000e+00 : f32
    %10 = vector.broadcast %cst_9 : f32 to vector<1x2048xf32>
    %11 = arith.divf %0, %10 : vector<1x2048xf32>
    %c0_10 = arith.constant 0 : index
    %c0_11 = arith.constant 0 : index
    %12 = vector.load %arg5[%c0_10, %c0_11] : memref<1x2048xf32, #tpu.memory_space<vmem>>, vector<1x2048xf32>
    tpu.vector_store %arg5[%c0_10, %c0_11], %11 {strides = array<i32>} : memref<1x2048xf32, #tpu.memory_space<vmem>>, vector<1x2048xf32>,
    %cst_12 = arith.constant 1.000000e+00 : f32
    %13 = vector.broadcast %cst_12 : f32 to vector<1x2048xf32>
    %14 = arith.cmpf ogt, %0, %13 : vector<1x2048xf32>
    %c0_13 = arith.constant 0 : index
    %c0_14 = arith.constant 0 : index
    %15 = vector.load %arg6[%c0_13, %c0_14] : memref<1x2048xi32, #tpu.memory_space<vmem>>, vector<1x2048xi32>
    %16 = arith.extui %14 : vector<1x2048xi1> to vector<1x2048xi32>
    %cst_15 = arith.constant dense<0> : vector<1x2048xi32>
    %17 = arith.cmpi ne, %15, %cst_15 : vector<1x2048xi32>
    tpu.vector_store %arg6[%c0_13, %c0_14], %16 {strides = array<i32>} : memref<1x2048xi32, #tpu.memory_space<vmem>>, vector<1x2048xi32>,
    %cst_16 = arith.constant 2.000000e+00 : f32
    %18 = vector.broadcast %cst_16 : f32 to vector<1x2048xf32>
    %19 = arith.cmpf olt, %0, %18 : vector<1x2048xf32>
    %c0_17 = arith.constant 0 : index
    %c0_18 = arith.constant 0 : index
    %20 = vector.load %arg7[%c0_17, %c0_18] : memref<1x2048xi32, #tpu.memory_space<vmem>>, vector<1x2048xi32>
    %21 = arith.extui %19 : vector<1x2048xi1> to vector<1x2048xi32>
    %cst_19 = arith.constant dense<0> : vector<1x2048xi32>
    %22 = arith.cmpi ne, %20, %cst_19 : vector<1x2048xi32>
    tpu.vector_store %arg7[%c0_17, %c0_18], %21 {strides = array<i32>} : memref<1x2048xi32, #tpu.memory_space<vmem>>, vector<1x2048xi32>,
    %cst_20 = arith.constant 2.000000e+00 : f32
    %23 = vector.broadcast %cst_20 : f32 to vector<1x2048xf32>
    %24 = arith.cmpf oeq, %0, %23 : vector<1x2048xf32>
    %c0_21 = arith.constant 0 : index
    %c0_22 = arith.constant 0 : index
    %25 = vector.load %arg8[%c0_21, %c0_22] : memref<1x2048xi32, #tpu.memory_space<vmem>>, vector<1x2048xi32>
    %26 = arith.extui %24 : vector<1x2048xi1> to vector<1x2048xi32>
    %cst_23 = arith.constant dense<0> : vector<1x2048xi32>
    %27 = arith.cmpi ne, %25, %cst_23 : vector<1x2048xi32>
    tpu.vector_store %arg8[%c0_21, %c0_22], %26 {strides = array<i32>} : memref<1x2048xi32, #tpu.memory_space<vmem>>, vector<1x2048xi32>,
    return
  }
  func.func @transform_0(%arg0: i32) -> (i32, i32) {
    %c0_i32 = arith.constant 0 : i32
    %c0_i32_0 = arith.constant 0 : i32
    return %arg0, %c0_i32 : i32, i32
  }
  func.func @transform_1(%arg0: i32) -> (i32, i32) {
    %c0_i32 = arith.constant 0 : i32
    %c0_i32_0 = arith.constant 0 : i32
    return %arg0, %c0_i32 : i32, i32
  }
  func.func @transform_2(%arg0: i32) -> (i32, i32) {
    %c0_i32 = arith.constant 0 : i32
    %c0_i32_0 = arith.constant 0 : i32
    return %arg0, %c0_i32 : i32, i32
  }
  func.func @transform_3(%arg0: i32) -> (i32, i32) {
    %c0_i32 = arith.constant 0 : i32
    %c0_i32_0 = arith.constant 0 : i32
    return %arg0, %c0_i32 : i32, i32
  }
  func.func @transform_4(%arg0: i32) -> (i32, i32) {
    %c0_i32 = arith.constant 0 : i32
    %c0_i32_0 = arith.constant 0 : i32
    return %arg0, %c0_i32 : i32, i32
  }
  func.func @transform_5(%arg0: i32) -> (i32, i32) {
    %c0_i32 = arith.constant 0 : i32
    %c0_i32_0 = arith.constant 0 : i32
    return %arg0, %c0_i32 : i32, i32
  }
  func.func @transform_6(%arg0: i32) -> (i32, i32) {
    %c0_i32 = arith.constant 0 : i32
    %c0_i32_0 = arith.constant 0 : i32
    return %arg0, %c0_i32 : i32, i32
  }
  func.func @transform_7(%arg0: i32) -> (i32, i32) {
    %c0_i32 = arith.constant 0 : i32
    %c0_i32_0 = arith.constant 0 : i32
    return %arg0, %c0_i32 : i32, i32
  }
}

module attributes {stable_mosaic.version = 11 : i64} {
  func.func @_elementwise_kernel(%arg0: i32, %arg1: memref<1x2048xf32, #tpu.memory_space<vmem>>, %arg2: memref<1x2048xf32, #tpu.memory_space<vmem>>, %arg3: memref<1x2048xf32, #tpu.memory_space<vmem>>, %arg4: memref<1x2048xf32, #tpu.memory_space<vmem>>, %arg5: memref<1x2048xf32, #tpu.memory_space<vmem>>, %arg6: memref<1x2048xi8, #tpu.memory_space<vmem>>, %arg7: memref<1x2048xi8, #tpu.memory_space<vmem>>, %arg8: memref<1x2048xi8, #tpu.memory_space<vmem>>) attributes {dimension_semantics = [#tpu.dimension_semantics<parallel>], iteration_bounds = array<i64: 1>, scalar_prefetch = 0 : i64, scratch_operands = 0 : i64, tpu.core_type = #tpu.core_type<tc>, window_params = [{transform_indices = @transform_0, window_bounds = array<i64: 1, 2048>}, {transform_indices = @transform_1, window_bounds = array<i64: 1, 2048>}, {transform_indices = @transform_2, window_bounds = array<i64: 1, 2048>}, {transform_indices = @transform_3, window_bounds = array<i64: 1, 2048>}, {transform_indices = @transform_4, window_bounds = array<i64: 1, 2048>}, {transform_indices = @transform_5, window_bounds = array<i64: 1, 2048>}, {transform_indices = @transform_6, window_bounds = array<i64: 1, 2048>}, {transform_indices = @transform_7, window_bounds = array<i64: 1, 2048>}]} {
    %c0 = arith.constant 0 : index
    %c0_0 = arith.constant 0 : index
    %0 = vector.load %arg1[%c0, %c0_0] : memref<1x2048xf32, #tpu.memory_space<vmem>>, vector<1x2048xf32>
    %cst = arith.constant 2.000000e+00 : f32
    %1 = vector.broadcast %cst : f32 to vector<1x2048xf32>
    %2 = arith.addf %0, %1 : vector<1x2048xf32>
    %c0_1 = arith.constant 0 : index
    %c0_2 = arith.constant 0 : index
    %3 = vector.load %arg2[%c0_1, %c0_2] : memref<1x2048xf32, #tpu.memory_space<vmem>>, vector<1x2048xf32>
    tpu.vector_store %arg2[%c0_1, %c0_2], %2 {strides = array<i32>} : memref<1x2048xf32, #tpu.memory_space<vmem>>, vector<1x2048xf32>,
    %cst_3 = arith.constant 3.000000e+00 : f32
    %4 = vector.broadcast %cst_3 : f32 to vector<1x2048xf32>
    %5 = arith.subf %0, %4 : vector<1x2048xf32>
    %c0_4 = arith.constant 0 : index
    %c0_5 = arith.constant 0 : index
    %6 = vector.load %arg3[%c0_4, %c0_5] : memref<1x2048xf32, #tpu.memory_space<vmem>>, vector<1x2048xf32>
    tpu.vector_store %arg3[%c0_4, %c0_5], %5 {strides = array<i32>} : memref<1x2048xf32, #tpu.memory_space<vmem>>, vector<1x2048xf32>,
    %cst_6 = arith.constant 4.000000e+00 : f32
    %7 = vector.broadcast %cst_6 : f32 to vector<1x2048xf32>
    %8 = arith.mulf %0, %7 : vector<1x2048xf32>
    %c0_7 = arith.constant 0 : index
    %c0_8 = arith.constant 0 : index
    %9 = vector.load %arg4[%c0_7, %c0_8] : memref<1x2048xf32, #tpu.memory_space<vmem>>, vector<1x2048xf32>
    tpu.vector_store %arg4[%c0_7, %c0_8], %8 {strides = array<i32>} : memref<1x2048xf32, #tpu.memory_space<vmem>>, vector<1x2048xf32>,
    %cst_9 = arith.constant 5.000000e+00 : f32
    %10 = vector.broadcast %cst_9 : f32 to vector<1x2048xf32>
    %11 = arith.divf %0, %10 : vector<1x2048xf32>
    %c0_10 = arith.constant 0 : index
    %c0_11 = arith.constant 0 : index
    %12 = vector.load %arg5[%c0_10, %c0_11] : memref<1x2048xf32, #tpu.memory_space<vmem>>, vector<1x2048xf32>
    tpu.vector_store %arg5[%c0_10, %c0_11], %11 {strides = array<i32>} : memref<1x2048xf32, #tpu.memory_space<vmem>>, vector<1x2048xf32>,
    %cst_12 = arith.constant 1.000000e+00 : f32
    %13 = vector.broadcast %cst_12 : f32 to vector<1x2048xf32>
    %14 = arith.cmpf ogt, %0, %13 : vector<1x2048xf32>
    %15 = arith.extui %14 : vector<1x2048xi1> to vector<1x2048xi8>
    %c0_13 = arith.constant 0 : index
    %c0_14 = arith.constant 0 : index
    %16 = vector.load %arg6[%c0_13, %c0_14] : memref<1x2048xi8, #tpu.memory_space<vmem>>, vector<1x2048xi8>
    tpu.vector_store %arg6[%c0_13, %c0_14], %15 {strides = array<i32>} : memref<1x2048xi8, #tpu.memory_space<vmem>>, vector<1x2048xi8>,
    %cst_15 = arith.constant 2.000000e+00 : f32
    %17 = vector.broadcast %cst_15 : f32 to vector<1x2048xf32>
    %18 = arith.cmpf olt, %0, %17 : vector<1x2048xf32>
    %19 = arith.extui %18 : vector<1x2048xi1> to vector<1x2048xi8>
    %c0_16 = arith.constant 0 : index
    %c0_17 = arith.constant 0 : index
    %20 = vector.load %arg7[%c0_16, %c0_17] : memref<1x2048xi8, #tpu.memory_space<vmem>>, vector<1x2048xi8>
    tpu.vector_store %arg7[%c0_16, %c0_17], %19 {strides = array<i32>} : memref<1x2048xi8, #tpu.memory_space<vmem>>, vector<1x2048xi8>,
    %cst_18 = arith.constant 2.000000e+00 : f32
    %21 = vector.broadcast %cst_18 : f32 to vector<1x2048xf32>
    %22 = arith.cmpf oeq, %0, %21 : vector<1x2048xf32>
    %23 = arith.extui %22 : vector<1x2048xi1> to vector<1x2048xi8>
    %c0_19 = arith.constant 0 : index
    %c0_20 = arith.constant 0 : index
    %24 = vector.load %arg8[%c0_19, %c0_20] : memref<1x2048xi8, #tpu.memory_space<vmem>>, vector<1x2048xi8>
    tpu.vector_store %arg8[%c0_19, %c0_20], %23 {strides = array<i32>} : memref<1x2048xi8, #tpu.memory_space<vmem>>, vector<1x2048xi8>,
    return
  }
  func.func @transform_0(%arg0: i32) -> (i32, i32) {
    %c0_i32 = arith.constant 0 : i32
    %c0_i32_0 = arith.constant 0 : i32
    return %arg0, %c0_i32 : i32, i32
  }
  func.func @transform_1(%arg0: i32) -> (i32, i32) {
    %c0_i32 = arith.constant 0 : i32
    %c0_i32_0 = arith.constant 0 : i32
    return %arg0, %c0_i32 : i32, i32
  }
  func.func @transform_2(%arg0: i32) -> (i32, i32) {
    %c0_i32 = arith.constant 0 : i32
    %c0_i32_0 = arith.constant 0 : i32
    return %arg0, %c0_i32 : i32, i32
  }
  func.func @transform_3(%arg0: i32) -> (i32, i32) {
    %c0_i32 = arith.constant 0 : i32
    %c0_i32_0 = arith.constant 0 : i32
    return %arg0, %c0_i32 : i32, i32
  }
  func.func @transform_4(%arg0: i32) -> (i32, i32) {
    %c0_i32 = arith.constant 0 : i32
    %c0_i32_0 = arith.constant 0 : i32
    return %arg0, %c0_i32 : i32, i32
  }
  func.func @transform_5(%arg0: i32) -> (i32, i32) {
    %c0_i32 = arith.constant 0 : i32
    %c0_i32_0 = arith.constant 0 : i32
    return %arg0, %c0_i32 : i32, i32
  }
  func.func @transform_6(%arg0: i32) -> (i32, i32) {
    %c0_i32 = arith.constant 0 : i32
    %c0_i32_0 = arith.constant 0 : i32
    return %arg0, %c0_i32 : i32, i32
  }
  func.func @transform_7(%arg0: i32) -> (i32, i32) {
    %c0_i32 = arith.constant 0 : i32
    %c0_i32_0 = arith.constant 0 : i32
    return %arg0, %c0_i32 : i32, i32
  }
}

</mosaic_0001>

<llo_original>
// kernel: tpu_custom_call.1
$region0: #{tpu_custom_call.1}
  #allocation0 [shape = 'u32[]', space=smem, size = 0x4, offset = 0x4, fixed_abs, tag = 'smem constant byte address 0x4 - core index']
  #allocation1 [shape = 'u32[72,128]{1,0:T(1,128)}', space=vmem, size = 0x9000, scoped, tag = 'internal scratch']
  %s0 = inlined_call_operand.hbm [shape: f32[1,2048], index: 0, kind: input, shape index: {}]
  %s1 = inlined_call_operand.hbm [shape: f32[1,2048], index: 1, kind: output, shape index: {0}]
  %s2 = inlined_call_operand.hbm [shape: f32[1,2048], index: 2, kind: output, shape index: {1}]
  %s3 = inlined_call_operand.hbm [shape: f32[1,2048], index: 3, kind: output, shape index: {2}]
  %s4 = inlined_call_operand.hbm [shape: f32[1,2048], index: 4, kind: output, shape index: {3}]
  %s5 = inlined_call_operand.vmem [shape: s32[1,2048], index: 5, kind: output, shape index: {4}]
  %s6 = inlined_call_operand.vmem [shape: s32[1,2048], index: 6, kind: output, shape index: {5}]
  %s7 = inlined_call_operand.vmem [shape: s32[1,2048], index: 7, kind: output, shape index: {6}]
  %8 = xla_tuple %s1, %s2, %s3, %s4, %s5, %s6, %s7
  %s9 = sld [smem:[#allocation0]]
  $region66: #{tpu_custom_call.1} parent=0
    _
  %s11 = ssub.s32 1, %s9
  %s12 = scalar_select 0, %s11, %s9
  $region1: #{tpu_custom_call.1} parent=0
    #allocation2 [shape = 'u8[8192]{0}', space=vmem, size = 0x2000, scoped, tag = 'input window, operand 0, single buffered']
    #allocation3 [shape = 's32[1]{0}', space=sflag, size = 0x4, scoped, tag = 'scoped memory for tpu_custom_call.1']
    #allocation4 [shape = 's32[1]{0}', space=sflag, size = 0x4, scoped, tag = 'scoped memory for tpu_custom_call.1']
    #allocation5 [shape = 'u8[8192]{0}', space=vmem, size = 0x2000, scoped, tag = 'output window, operand 0, single buffered']
    #allocation6 [shape = 'u8[8192]{0}', space=vmem, size = 0x2000, scoped, tag = 'output window, operand 1, single buffered']
    #allocation7 [shape = 's32[1]{0}', space=sflag, size = 0x4, scoped, tag = 'scoped memory for tpu_custom_call.1']
    #allocation8 [shape = 'u8[8192]{0}', space=vmem, size = 0x2000, scoped, tag = 'output window, operand 2, single buffered']
    #allocation9 [shape = 'u8[8192]{0}', space=vmem, size = 0x2000, scoped, tag = 'output window, operand 3, single buffered']
    #allocation10 [shape = 's32[1]{0}', space=sflag, size = 0x4, scoped, tag = 'scoped memory for tpu_custom_call.1']
    %13 = vsyncpa [#allocation3], 0
    %14 = vsyncpa [#allocation4], 0
    %15 = vsyncpa [#allocation7], 0
    %16 = vsyncpa [#allocation10], 0
    // Predicated region
    $region2: #{tpu_custom_call.1} parent=1 // pred_check
      _
    $region3: #{tpu_custom_call.1} parent=1 // pred_check_branch
      %18 = sbr.rel (0) target = $region5
    $region4: #{tpu_custom_call.1} parent=1 // pred_region
      %20 = vsyncadd [#allocation3], 0
      %s22 = sshll.u32 %s0, 4
      %s23 = int_to_ptr.hbm [resolvable:$true] %s22
      %s24 = sshll.u32 [#allocation2], 4
      %s25 = int_to_ptr.vmem [resolvable:$true] %s24
      %27 = dma.hbm_to_vmem [thread:$0]  %s23, 256, %s25, [#allocation3]
    $region5: #{tpu_custom_call.1} parent=1 // pred_fallthru
      _
    // Predicated region
    $region6: #{tpu_custom_call.1} parent=1 // pred_check
      _
    $region7: #{tpu_custom_call.1} parent=1 // pred_check_branch
      %29 = sbr.rel (0) target = $region9
    $region8: #{tpu_custom_call.1} parent=1 // pred_region
      %31 = dma.done [#allocation3], 256
    $region9: #{tpu_custom_call.1} parent=1 // pred_fallthru
      _
    %v32 = vld [vmem:[#allocation2] sm:$0xff]
    %v33 = vld [vmem:[#allocation2 + $0x8] sm:$0xff]
    %v34 = vadd.f32 %v32, 2.0
    %v35 = vadd.f32 %v33, 2.0
    %36 = vst [vmem:[#allocation5] sm:$0xff] %v34
    %37 = vst [vmem:[#allocation5 + $0x8] sm:$0xff] %v35
    %v38 = vsub.f32 %v32, 3.0
    %v39 = vsub.f32 %v33, 3.0
    %40 = vst [vmem:[#allocation6] sm:$0xff] %v38
    %41 = vst [vmem:[#allocation6 + $0x8] sm:$0xff] %v39
    %v42 = vmul.f32 %v32, 4.0
    %v43 = vmul.f32 %v33, 4.0
    %44 = vst [vmem:[#allocation8] sm:$0xff] %v42
    %45 = vst [vmem:[#allocation8 + $0x8] sm:$0xff] %v43
    %v46 = vrcp.pop 5.0
    %v47 = vmul.f32 5.0, %v46
    %v48 = vsub.f32 1.0, %v47
    %v49 = vmul.f32 %v46, %v48
    %v50 = vadd.f32 %v46, %v49
    %vm51 = vweird.f32 %v46
    %v52 = vsel %vm51, %v46, %v50
    %v53 = vmul.f32 %v32, %v52
    %v54 = vmul.f32 %v33, %v52
    %55 = vst [vmem:[#allocation9] sm:$0xff] %v53
    %56 = vst [vmem:[#allocation9 + $0x8] sm:$0xff] %v54
    %vm57 = vcmp.gt.f32.partialorder %v32, 1.0
    %vm58 = vcmp.gt.f32.partialorder %v33, 1.0
    %v59 = vsel %vm57, 1, 0
    %v60 = vsel %vm58, 1, 0
    %61 = vst [vmem:[%s5] sm:$0xff] %v59
    %62 = vst [vmem:[%s5 + $0x8] sm:$0xff] %v60
    %vm63 = vcmp.lt.f32.partialorder %v32, 2.0
    %vm64 = vcmp.lt.f32.partialorder %v33, 2.0
    %v65 = vsel %vm63, 1, 0
    %v66 = vsel %vm64, 1, 0
    %67 = vst [vmem:[%s6] sm:$0xff] %v65
    %68 = vst [vmem:[%s6 + $0x8] sm:$0xff] %v66
    %vm69 = vcmp.eq.f32.partialorder %v32, 2.0
    %vm70 = vcmp.eq.f32.partialorder %v33, 2.0
    %v71 = vsel %vm69, 1, 0
    %v72 = vsel %vm70, 1, 0
    %73 = vst [vmem:[%s7] sm:$0xff] %v71
    %74 = vst [vmem:[%s7 + $0x8] sm:$0xff] %v72
    // Predicated region
    $region10: #{tpu_custom_call.1} parent=1 // pred_check
      _
    $region11: #{tpu_custom_call.1} parent=1 // pred_check_branch
      %76 = sbr.rel (0) target = $region13
    $region12: #{tpu_custom_call.1} parent=1 // pred_region
      %78 = vsyncadd [#allocation4], 0
      %s80 = sshll.u32 [#allocation5], 4
      %s81 = int_to_ptr.vmem [resolvable:$true] %s80
      %s82 = sshll.u32 %s1, 4
      %s83 = int_to_ptr.hbm [resolvable:$true] %s82
      %85 = dma.vmem_to_hbm [thread:$0]  %s81, 256, %s83, [#allocation4]
    $region13: #{tpu_custom_call.1} parent=1 // pred_fallthru
      _
    // Predicated region
    $region14: #{tpu_custom_call.1} parent=1 // pred_check
      _
    $region15: #{tpu_custom_call.1} parent=1 // pred_check_branch
      %87 = sbr.rel (0) target = $region17
    $region16: #{tpu_custom_call.1} parent=1 // pred_region
      %89 = vsyncadd [#allocation7], 0
      %s91 = sshll.u32 [#allocation6], 4
      %s92 = int_to_ptr.vmem [resolvable:$true] %s91
      %s93 = sshll.u32 %s2, 4
      %s94 = int_to_ptr.hbm [resolvable:$true] %s93
      %96 = dma.vmem_to_hbm [thread:$0]  %s92, 256, %s94, [#allocation7]
    $region17: #{tpu_custom_call.1} parent=1 // pred_fallthru
      _
    // Predicated region
    $region18: #{tpu_custom_call.1} parent=1 // pred_check
      _
    $region19: #{tpu_custom_call.1} parent=1 // pred_check_branch
      %98 = sbr.rel (0) target = $region21
    $region20: #{tpu_custom_call.1} parent=1 // pred_region
      %100 = vsyncadd [#allocation7], 0
      %s102 = sshll.u32 [#allocation8], 4
      %s103 = int_to_ptr.vmem [resolvable:$true] %s102
      %s104 = sshll.u32 %s3, 4
      %s105 = int_to_ptr.hbm [resolvable:$true] %s104
      %107 = dma.vmem_to_hbm [thread:$0]  %s103, 256, %s105, [#allocation7]
    $region21: #{tpu_custom_call.1} parent=1 // pred_fallthru
      _
    // Predicated region
    $region22: #{tpu_custom_call.1} parent=1 // pred_check
      _
    $region23: #{tpu_custom_call.1} parent=1 // pred_check_branch
      %109 = sbr.rel (0) target = $region25
    $region24: #{tpu_custom_call.1} parent=1 // pred_region
      %111 = vsyncadd [#allocation10], 0
      %s113 = sshll.u32 [#allocation9], 4
      %s114 = int_to_ptr.vmem [resolvable:$true] %s113
      %s115 = sshll.u32 %s4, 4
      %s116 = int_to_ptr.hbm [resolvable:$true] %s115
      %118 = dma.vmem_to_hbm [thread:$0]  %s114, 256, %s116, [#allocation10]
    $region25: #{tpu_custom_call.1} parent=1 // pred_fallthru
      _
    // Predicated region
    $region26: #{tpu_custom_call.1} parent=1 // pred_check
      _
    $region27: #{tpu_custom_call.1} parent=1 // pred_check_branch
      %120 = sbr.rel (0) target = $region29
    $region28: #{tpu_custom_call.1} parent=1 // pred_region
      _
    $region29: #{tpu_custom_call.1} parent=1 // pred_fallthru
      _
    // Predicated region
    $region30: #{tpu_custom_call.1} parent=1 // pred_check
      _
    $region31: #{tpu_custom_call.1} parent=1 // pred_check_branch
      %122 = sbr.rel (0) target = $region33
    $region32: #{tpu_custom_call.1} parent=1 // pred_region
      _
    $region33: #{tpu_custom_call.1} parent=1 // pred_fallthru
      _
    // Predicated region
    $region34: #{tpu_custom_call.1} parent=1 // pred_check
      _
    $region35: #{tpu_custom_call.1} parent=1 // pred_check_branch
      %124 = sbr.rel (0) target = $region37
    $region36: #{tpu_custom_call.1} parent=1 // pred_region
      _
    $region37: #{tpu_custom_call.1} parent=1 // pred_fallthru
      _
    // Predicated region
    $region38: #{tpu_custom_call.1} parent=1 // pred_check
      _
    $region39: #{tpu_custom_call.1} parent=1 // pred_check_branch
      %126 = sbr.rel (0) target = $region41
    $region40: #{tpu_custom_call.1} parent=1 // pred_region
      %128 = dma.done [#allocation4], 256
    $region41: #{tpu_custom_call.1} parent=1 // pred_fallthru
      _
    // Predicated region
    $region42: #{tpu_custom_call.1} parent=1 // pred_check
      _
    $region43: #{tpu_custom_call.1} parent=1 // pred_check_branch
      %130 = sbr.rel (0) target = $region45
    $region44: #{tpu_custom_call.1} parent=1 // pred_region
      %132 = dma.done [#allocation7], 256
    $region45: #{tpu_custom_call.1} parent=1 // pred_fallthru
      _
    // Predicated region
    $region46: #{tpu_custom_call.1} parent=1 // pred_check
      _
    $region47: #{tpu_custom_call.1} parent=1 // pred_check_branch
      %134 = sbr.rel (0) target = $region49
    $region48: #{tpu_custom_call.1} parent=1 // pred_region
      %136 = dma.done [#allocation7], 256
    $region49: #{tpu_custom_call.1} parent=1 // pred_fallthru
      _
    // Predicated region
    $region50: #{tpu_custom_call.1} parent=1 // pred_check
      _
    $region51: #{tpu_custom_call.1} parent=1 // pred_check_branch
      %138 = sbr.rel (0) target = $region53
    $region52: #{tpu_custom_call.1} parent=1 // pred_region
      %140 = dma.done [#allocation10], 256
    $region53: #{tpu_custom_call.1} parent=1 // pred_fallthru
      _
    // Predicated region
    $region54: #{tpu_custom_call.1} parent=1 // pred_check
      _
    $region55: #{tpu_custom_call.1} parent=1 // pred_check_branch
      %142 = sbr.rel (0) target = $region57
    $region56: #{tpu_custom_call.1} parent=1 // pred_region
      _
    $region57: #{tpu_custom_call.1} parent=1 // pred_fallthru
      _
    // Predicated region
    $region58: #{tpu_custom_call.1} parent=1 // pred_check
      _
    $region59: #{tpu_custom_call.1} parent=1 // pred_check_branch
      %144 = sbr.rel (0) target = $region61
    $region60: #{tpu_custom_call.1} parent=1 // pred_region
      _
    $region61: #{tpu_custom_call.1} parent=1 // pred_fallthru
      _
    // Predicated region
    $region62: #{tpu_custom_call.1} parent=1 // pred_check
      _
    $region63: #{tpu_custom_call.1} parent=1 // pred_check_branch
      %146 = sbr.rel (0) target = $region65
    $region64: #{tpu_custom_call.1} parent=1 // pred_region
      _
    $region65: #{tpu_custom_call.1} parent=1 // pred_fallthru
      _
    %147 = vsyncpa [#allocation3], 1
    %148 = vsyncpa [#allocation4], 1
    %149 = vsyncpa [#allocation7], 1
    %150 = vsyncpa [#allocation10], 1

// kernel: tpu_custom_call.1
$region0: #{tpu_custom_call.1}
  #allocation0 [shape = 'u32[]', space=smem, size = 0x4, offset = 0x4, fixed_abs, tag = 'smem constant byte address 0x4 - core index']
  #allocation1 [shape = 'u32[72,128]{1,0:T(1,128)}', space=vmem, size = 0x9000, scoped, tag = 'internal scratch']
  %s0 = inlined_call_operand.hbm [shape: f32[1,2048], index: 0, kind: input, shape index: {}]
  %s1 = inlined_call_operand.hbm [shape: f32[1,2048], index: 1, kind: output, shape index: {0}]
  %s2 = inlined_call_operand.hbm [shape: f32[1,2048], index: 2, kind: output, shape index: {1}]
  %s3 = inlined_call_operand.hbm [shape: f32[1,2048], index: 3, kind: output, shape index: {2}]
  %s4 = inlined_call_operand.hbm [shape: f32[1,2048], index: 4, kind: output, shape index: {3}]
  %s5 = inlined_call_operand.hbm [shape: s8[1,2048], index: 5, kind: output, shape index: {4}]
  %s6 = inlined_call_operand.hbm [shape: s8[1,2048], index: 6, kind: output, shape index: {5}]
  %s7 = inlined_call_operand.hbm [shape: s8[1,2048], index: 7, kind: output, shape index: {6}]
  %8 = xla_tuple %s1, %s2, %s3, %s4, %s5, %s6, %s7
  %s9 = sld [smem:[#allocation0]]
  $region66: #{tpu_custom_call.1} parent=0
    _
  %s11 = ssub.s32 1, %s9
  %s12 = scalar_select 0, %s11, %s9
  $region1: #{tpu_custom_call.1} parent=0
    #allocation2 [shape = 'u8[8192]{0}', space=vmem, size = 0x2000, scoped, tag = 'input window, operand 0, single buffered']
    #allocation3 [shape = 's32[1]{0}', space=sflag, size = 0x4, scoped, tag = 'scoped memory for tpu_custom_call.1']
    #allocation4 [shape = 's32[1]{0}', space=sflag, size = 0x4, scoped, tag = 'scoped memory for tpu_custom_call.1']
    #allocation5 [shape = 'u8[8192]{0}', space=vmem, size = 0x2000, scoped, tag = 'output window, operand 0, single buffered']
    #allocation6 [shape = 'u8[8192]{0}', space=vmem, size = 0x2000, scoped, tag = 'output window, operand 1, single buffered']
    #allocation7 [shape = 's32[1]{0}', space=sflag, size = 0x4, scoped, tag = 'scoped memory for tpu_custom_call.1']
    #allocation8 [shape = 'u8[8192]{0}', space=vmem, size = 0x2000, scoped, tag = 'output window, operand 2, single buffered']
    #allocation9 [shape = 'u8[8192]{0}', space=vmem, size = 0x2000, scoped, tag = 'output window, operand 3, single buffered']
    #allocation10 [shape = 's32[1]{0}', space=sflag, size = 0x4, scoped, tag = 'scoped memory for tpu_custom_call.1']
    #allocation11 [shape = 'u8[8192]{0}', space=vmem, size = 0x2000, scoped, tag = 'output window, operand 4, single buffered']
    #allocation12 [shape = 'u8[8192]{0}', space=vmem, size = 0x2000, scoped, tag = 'output window, operand 5, single buffered']
    #allocation13 [shape = 's32[1]{0}', space=sflag, size = 0x4, scoped, tag = 'scoped memory for tpu_custom_call.1']
    #allocation14 [shape = 'u8[8192]{0}', space=vmem, size = 0x2000, scoped, tag = 'output window, operand 6, single buffered']
    %13 = vsyncpa [#allocation3], 0
    %14 = vsyncpa [#allocation4], 0
    %15 = vsyncpa [#allocation7], 0
    %16 = vsyncpa [#allocation10], 0
    %17 = vsyncpa [#allocation13], 0
    // Predicated region
    $region2: #{tpu_custom_call.1} parent=1 // pred_check
      _
    $region3: #{tpu_custom_call.1} parent=1 // pred_check_branch
      %19 = sbr.rel (0) target = $region5
    $region4: #{tpu_custom_call.1} parent=1 // pred_region
      %21 = vsyncadd [#allocation3], 0
      %s23 = sshll.u32 %s0, 4
      %s24 = int_to_ptr.hbm [resolvable:$true] %s23
      %s25 = sshll.u32 [#allocation2], 4
      %s26 = int_to_ptr.vmem [resolvable:$true] %s25
      %28 = dma.hbm_to_vmem [thread:$0]  %s24, 256, %s26, [#allocation3]
    $region5: #{tpu_custom_call.1} parent=1 // pred_fallthru
      _
    // Predicated region
    $region6: #{tpu_custom_call.1} parent=1 // pred_check
      _
    $region7: #{tpu_custom_call.1} parent=1 // pred_check_branch
      %30 = sbr.rel (0) target = $region9
    $region8: #{tpu_custom_call.1} parent=1 // pred_region
      %32 = dma.done [#allocation3], 256
    $region9: #{tpu_custom_call.1} parent=1 // pred_fallthru
      _
    %v35 = vld [vmem:[#allocation2] sm:$0xff]
    %v36 = vld [vmem:[#allocation2 + $0x8] sm:$0xff]
    %v37 = vadd.f32 %v35, 2.0
    %v38 = vadd.f32 %v36, 2.0
    %39 = vst [vmem:[#allocation5] sm:$0xff] %v37
    %40 = vst [vmem:[#allocation5 + $0x8] sm:$0xff] %v38
    %v41 = vsub.f32 %v35, 3.0
    %v42 = vsub.f32 %v36, 3.0
    %43 = vst [vmem:[#allocation6] sm:$0xff] %v41
    %44 = vst [vmem:[#allocation6 + $0x8] sm:$0xff] %v42
    %v45 = vmul.f32 %v35, 4.0
    %v46 = vmul.f32 %v36, 4.0
    %47 = vst [vmem:[#allocation8] sm:$0xff] %v45
    %48 = vst [vmem:[#allocation8 + $0x8] sm:$0xff] %v46
    %v49 = vrcp.pop 5.0
    %v50 = vmul.f32 5.0, %v49
    %v51 = vsub.f32 1.0, %v50
    %v52 = vmul.f32 %v49, %v51
    %v53 = vadd.f32 %v49, %v52
    %vm54 = vweird.f32 %v49
    %v55 = vsel %vm54, %v49, %v53
    %v56 = vmul.f32 %v35, %v55
    %v57 = vmul.f32 %v36, %v55
    %58 = vst [vmem:[#allocation9] sm:$0xff] %v56
    %59 = vst [vmem:[#allocation9 + $0x8] sm:$0xff] %v57
    %vm60 = vcmp.gt.f32.partialorder %v35, 1.0
    %vm61 = vcmp.gt.f32.partialorder %v36, 1.0
    %v62 = vsel %vm60, 1, 0
    %v63 = vsel %vm61, 1, 0
    %v65 = vunpack.c.l.s4 286326784
    %v66 = vunpack.c.0.s8 %v65
    %v67 = vperm.slane %v62, %v66
    %v69 = vunpack.c.l.s4 858989090
    %v70 = vunpack.c.0.s8 %v69
    %v71 = vperm.slane %v62, %v70
    %v73 = vunpack.c.l.s4 1431651396
    %v74 = vunpack.c.0.s8 %v73
    %v75 = vperm.slane %v62, %v74
    %v77 = vunpack.c.l.s4 2004313702
    %v78 = vunpack.c.0.s8 %v77
    %v79 = vperm.slane %v62, %v78
    %v81 = vunpack.c.l.s4 286326784
    %v82 = vunpack.c.0.s8 %v81
    %v83 = vperm.slane %v63, %v82
    %v85 = vunpack.c.l.s4 858989090
    %v86 = vunpack.c.0.s8 %v85
    %v87 = vperm.slane %v63, %v86
    %v89 = vunpack.c.l.s4 1431651396
    %v90 = vunpack.c.0.s8 %v89
    %v91 = vperm.slane %v63, %v90
    %v93 = vunpack.c.l.s4 2004313702
    %v94 = vunpack.c.0.s8 %v93
    %v95 = vperm.slane %v63, %v94
    %vm96 = vcmp.ne.s32.totalorder %v67, 0
    %vm97 = vcmp.ne.s32.totalorder %v71, 0
    %vm98 = vcmp.ne.s32.totalorder %v75, 0
    %vm99 = vcmp.ne.s32.totalorder %v79, 0
    %vm100 = vcmp.ne.s32.totalorder %v83, 0
    %vm101 = vcmp.ne.s32.totalorder %v87, 0
    %vm102 = vcmp.ne.s32.totalorder %v91, 0
    %vm103 = vcmp.ne.s32.totalorder %v95, 0
    %v104 = vsel %vm96, 1, 0
    %v105 = vsel %vm97, 1, 0
    %v106 = vsel %vm98, 1, 0
    %v107 = vsel %vm99, 1, 0
    %v108 = vsel %vm100, 1, 0
    %v109 = vsel %vm101, 1, 0
    %v110 = vsel %vm102, 1, 0
    %v111 = vsel %vm103, 1, 0
    %v112 = vpack.c.b16 %v105, %v104
    %v113 = vpack.c.b16 %v107, %v106
    %v114 = vpack.c.b8 %v113, %v112
    %v115 = vpack.c.b16 %v109, %v108
    %v116 = vpack.c.b16 %v111, %v110
    %v117 = vpack.c.b8 %v116, %v115
    %vm118 = vnez %v114
    %vm119 = vnez %v117
    %v120 = vsel %vm118, 16843009, 0
    %v121 = vsel %vm119, 16843009, 0
    %123 = vst [vmem:[#allocation1] ss:$9 sm:$0xff] %v120
    %v124 = vld [vmem:[#allocation1] sm:$0xff]
    %v126 = vld [vmem:[#allocation1 + $0x9] sm:$0xff]
    %v128 = vld [vmem:[#allocation1 + $0x12] sm:$0xff]
    %v130 = vld [vmem:[#allocation1 + $0x1b] sm:$0xff]
    %v132 = vld [vmem:[#allocation1 + $0x24] sm:$0xff]
    %v134 = vld [vmem:[#allocation1 + $0x2d] sm:$0xff]
    %v136 = vld [vmem:[#allocation1 + $0x36] sm:$0xff]
    %v138 = vld [vmem:[#allocation1 + $0x3f] sm:$0xff]
    %141 = vst [vmem:[#allocation1] ss:$9 sm:$0xff] %v121
    %v142 = vld [vmem:[#allocation1] sm:$0xff]
    %v144 = vld [vmem:[#allocation1 + $0x9] sm:$0xff]
    %v146 = vld [vmem:[#allocation1 + $0x12] sm:$0xff]
    %v148 = vld [vmem:[#allocation1 + $0x1b] sm:$0xff]
    %v150 = vld [vmem:[#allocation1 + $0x24] sm:$0xff]
    %v152 = vld [vmem:[#allocation1 + $0x2d] sm:$0xff]
    %v154 = vld [vmem:[#allocation1 + $0x36] sm:$0xff]
    %v156 = vld [vmem:[#allocation1 + $0x3f] sm:$0xff]
    %vm158 = vnez %v124
    %vm159 = vnez %v126
    %vm160 = vnez %v128
    %vm161 = vnez %v130
    %vm162 = vnez %v132
    %vm163 = vnez %v134
    %vm164 = vnez %v136
    %vm165 = vnez %v138
    %vm166 = vnez %v142
    %vm167 = vnez %v144
    %vm168 = vnez %v146
    %vm169 = vnez %v148
    %vm170 = vnez %v150
    %vm171 = vnez %v152
    %vm172 = vnez %v154
    %vm173 = vnez %v156
    %v174 = vsel %vm158, 16843009, 0
    %v175 = vsel %vm159, 16843009, 0
    %v176 = vsel %vm160, 16843009, 0
    %v177 = vsel %vm161, 16843009, 0
    %v178 = vsel %vm162, 16843009, 0
    %v179 = vsel %vm163, 16843009, 0
    %v180 = vsel %vm164, 16843009, 0
    %v181 = vsel %vm165, 16843009, 0
    %v182 = vsel %vm166, 16843009, 0
    %v183 = vsel %vm167, 16843009, 0
    %v184 = vsel %vm168, 16843009, 0
    %v185 = vsel %vm169, 16843009, 0
    %v186 = vsel %vm170, 16843009, 0
    %v187 = vsel %vm171, 16843009, 0
    %v188 = vsel %vm172, 16843009, 0
    %v189 = vsel %vm173, 16843009, 0
    %v190 = vrot.slane %v175, 7
    %v191 = vrot.slane %v176, 6
    %v192 = vrot.slane %v177, 5
    %v193 = vrot.slane %v178, 4
    %v194 = vrot.slane %v179, 3
    %v195 = vrot.slane %v180, 2
    %v196 = vrot.slane %v181, 1
    %v197 = vrot.slane %v183, 7
    %v198 = vrot.slane %v184, 6
    %v199 = vrot.slane %v185, 5
    %v200 = vrot.slane %v186, 4
    %v201 = vrot.slane %v187, 3
    %v202 = vrot.slane %v188, 2
    %v203 = vrot.slane %v189, 1
    %vm204 = vcmask 1040384
    %v207 = vsel %vm204, %v174, %v190
    %vm208 = vcmask 1042434
    %v211 = vsel %vm208, %v191, %v192
    %vm212 = vcmask 1041408
    %v213 = vsel %vm212, %v207, %v211
    %vm214 = vcmask 1044484
    %v217 = vsel %vm214, %v193, %v194
    %vm218 = vcmask 1046534
    %v221 = vsel %vm218, %v195, %v196
    %vm222 = vcmask 1045508
    %v223 = vsel %vm222, %v217, %v221
    %vm224 = vcmask 1043456
    %v225 = vsel %vm224, %v213, %v223
    %v229 = vsel %vm204, %v182, %v197
    %v232 = vsel %vm208, %v198, %v199
    %v233 = vsel %vm212, %v229, %v232
    %v236 = vsel %vm214, %v200, %v201
    %v239 = vsel %vm218, %v202, %v203
    %v240 = vsel %vm222, %v236, %v239
    %v241 = vsel %vm224, %v233, %v240
    %vm243 = vcmask 1040384
    %vm244 = vsmask.f32 0
    %vm245 = vmand %vm243, %vm244
    %vm246 = vcmask 1041409
    %vm247 = vsmask.f32 1024
    %vm248 = vmand %vm246, %vm247
    %vm249 = vmor %vm248, %vm245
    %vm250 = vcmask 1042434
    %vm251 = vsmask.f32 2048
    %vm252 = vmand %vm250, %vm251
    %vm253 = vmor %vm252, %vm249
    %vm254 = vcmask 1043459
    %vm255 = vsmask.f32 3072
    %vm256 = vmand %vm254, %vm255
    %vm257 = vmor %vm256, %vm253
    %vm258 = vcmask 1044484
    %vm259 = vsmask.f32 4096
    %vm260 = vmand %vm258, %vm259
    %vm261 = vmor %vm260, %vm257
    %vm262 = vcmask 1045509
    %vm263 = vsmask.f32 5120
    %vm264 = vmand %vm262, %vm263
    %vm265 = vmor %vm264, %vm261
    %vm266 = vcmask 1046534
    %vm267 = vsmask.f32 6144
    %vm268 = vmand %vm266, %vm267
    %vm269 = vmor %vm268, %vm265
    %vm270 = vcmask 1047559
    %vm271 = vsmask.f32 7168
    %vm272 = vmand %vm270, %vm271
    %vm273 = vmor %vm272, %vm269
    %v274 = vld [vmem:[#allocation11] sm:$0xff]
    %v275 = vsel %vm273, %v225, %v274
    %276 = vst [vmem:[#allocation11] sm:$0xff] %v275
    %v277 = vld [vmem:[#allocation11 + $0x8] sm:$0xff]
    %v278 = vsel %vm273, %v241, %v277
    %279 = vst [vmem:[#allocation11 + $0x8] sm:$0xff] %v278
    %vm280 = vcmp.lt.f32.partialorder %v35, 2.0
    %vm281 = vcmp.lt.f32.partialorder %v36, 2.0
    %v282 = vsel %vm280, 1, 0
    %v283 = vsel %vm281, 1, 0
    %v285 = vunpack.c.l.s4 286326784
    %v286 = vunpack.c.0.s8 %v285
    %v287 = vperm.slane %v282, %v286
    %v289 = vunpack.c.l.s4 858989090
    %v290 = vunpack.c.0.s8 %v289
    %v291 = vperm.slane %v282, %v290
    %v293 = vunpack.c.l.s4 1431651396
    %v294 = vunpack.c.0.s8 %v293
    %v295 = vperm.slane %v282, %v294
    %v297 = vunpack.c.l.s4 2004313702
    %v298 = vunpack.c.0.s8 %v297
    %v299 = vperm.slane %v282, %v298
    %v301 = vunpack.c.l.s4 286326784
    %v302 = vunpack.c.0.s8 %v301
    %v303 = vperm.slane %v283, %v302
    %v305 = vunpack.c.l.s4 858989090
    %v306 = vunpack.c.0.s8 %v305
    %v307 = vperm.slane %v283, %v306
    %v309 = vunpack.c.l.s4 1431651396
    %v310 = vunpack.c.0.s8 %v309
    %v311 = vperm.slane %v283, %v310
    %v313 = vunpack.c.l.s4 2004313702
    %v314 = vunpack.c.0.s8 %v313
    %v315 = vperm.slane %v283, %v314
    %vm316 = vcmp.ne.s32.totalorder %v287, 0
    %vm317 = vcmp.ne.s32.totalorder %v291, 0
    %vm318 = vcmp.ne.s32.totalorder %v295, 0
    %vm319 = vcmp.ne.s32.totalorder %v299, 0
    %vm320 = vcmp.ne.s32.totalorder %v303, 0
    %vm321 = vcmp.ne.s32.totalorder %v307, 0
    %vm322 = vcmp.ne.s32.totalorder %v311, 0
    %vm323 = vcmp.ne.s32.totalorder %v315, 0
    %v324 = vsel %vm316, 1, 0
    %v325 = vsel %vm317, 1, 0
    %v326 = vsel %vm318, 1, 0
    %v327 = vsel %vm319, 1, 0
    %v328 = vsel %vm320, 1, 0
    %v329 = vsel %vm321, 1, 0
    %v330 = vsel %vm322, 1, 0
    %v331 = vsel %vm323, 1, 0
    %v332 = vpack.c.b16 %v325, %v324
    %v333 = vpack.c.b16 %v327, %v326
    %v334 = vpack.c.b8 %v333, %v332
    %v335 = vpack.c.b16 %v329, %v328
    %v336 = vpack.c.b16 %v331, %v330
    %v337 = vpack.c.b8 %v336, %v335
    %vm338 = vnez %v334
    %vm339 = vnez %v337
    %v340 = vsel %vm338, 16843009, 0
    %v341 = vsel %vm339, 16843009, 0
    %343 = vst [vmem:[#allocation1] ss:$9 sm:$0xff] %v340
    %v344 = vld [vmem:[#allocation1] sm:$0xff]
    %v346 = vld [vmem:[#allocation1 + $0x9] sm:$0xff]
    %v348 = vld [vmem:[#allocation1 + $0x12] sm:$0xff]
    %v350 = vld [vmem:[#allocation1 + $0x1b] sm:$0xff]
    %v352 = vld [vmem:[#allocation1 + $0x24] sm:$0xff]
    %v354 = vld [vmem:[#allocation1 + $0x2d] sm:$0xff]
    %v356 = vld [vmem:[#allocation1 + $0x36] sm:$0xff]
    %v358 = vld [vmem:[#allocation1 + $0x3f] sm:$0xff]
    %361 = vst [vmem:[#allocation1] ss:$9 sm:$0xff] %v341
    %v362 = vld [vmem:[#allocation1] sm:$0xff]
    %v364 = vld [vmem:[#allocation1 + $0x9] sm:$0xff]
    %v366 = vld [vmem:[#allocation1 + $0x12] sm:$0xff]
    %v368 = vld [vmem:[#allocation1 + $0x1b] sm:$0xff]
    %v370 = vld [vmem:[#allocation1 + $0x24] sm:$0xff]
    %v372 = vld [vmem:[#allocation1 + $0x2d] sm:$0xff]
    %v374 = vld [vmem:[#allocation1 + $0x36] sm:$0xff]
    %v376 = vld [vmem:[#allocation1 + $0x3f] sm:$0xff]
    %vm378 = vnez %v344
    %vm379 = vnez %v346
    %vm380 = vnez %v348
    %vm381 = vnez %v350
    %vm382 = vnez %v352
    %vm383 = vnez %v354
    %vm384 = vnez %v356
    %vm385 = vnez %v358
    %vm386 = vnez %v362
    %vm387 = vnez %v364
    %vm388 = vnez %v366
    %vm389 = vnez %v368
    %vm390 = vnez %v370
    %vm391 = vnez %v372
    %vm392 = vnez %v374
    %vm393 = vnez %v376
    %v394 = vsel %vm378, 16843009, 0
    %v395 = vsel %vm379, 16843009, 0
    %v396 = vsel %vm380, 16843009, 0
    %v397 = vsel %vm381, 16843009, 0
    %v398 = vsel %vm382, 16843009, 0
    %v399 = vsel %vm383, 16843009, 0
    %v400 = vsel %vm384, 16843009, 0
    %v401 = vsel %vm385, 16843009, 0
    %v402 = vsel %vm386, 16843009, 0
    %v403 = vsel %vm387, 16843009, 0
    %v404 = vsel %vm388, 16843009, 0
    %v405 = vsel %vm389, 16843009, 0
    %v406 = vsel %vm390, 16843009, 0
    %v407 = vsel %vm391, 16843009, 0
    %v408 = vsel %vm392, 16843009, 0
    %v409 = vsel %vm393, 16843009, 0
    %v410 = vrot.slane %v395, 7
    %v411 = vrot.slane %v396, 6
    %v412 = vrot.slane %v397, 5
    %v413 = vrot.slane %v398, 4
    %v414 = vrot.slane %v399, 3
    %v415 = vrot.slane %v400, 2
    %v416 = vrot.slane %v401, 1
    %v417 = vrot.slane %v403, 7
    %v418 = vrot.slane %v404, 6
    %v419 = vrot.slane %v405, 5
    %v420 = vrot.slane %v406, 4
    %v421 = vrot.slane %v407, 3
    %v422 = vrot.slane %v408, 2
    %v423 = vrot.slane %v409, 1
    %v426 = vsel %vm204, %v394, %v410
    %v429 = vsel %vm208, %v411, %v412
    %v430 = vsel %vm212, %v426, %v429
    %v433 = vsel %vm214, %v413, %v414
    %v436 = vsel %vm218, %v415, %v416
    %v437 = vsel %vm222, %v433, %v436
    %v438 = vsel %vm224, %v430, %v437
    %v442 = vsel %vm204, %v402, %v417
    %v445 = vsel %vm208, %v418, %v419
    %v446 = vsel %vm212, %v442, %v445
    %v449 = vsel %vm214, %v420, %v421
    %v452 = vsel %vm218, %v422, %v423
    %v453 = vsel %vm222, %v449, %v452
    %v454 = vsel %vm224, %v446, %v453
    %v456 = vld [vmem:[#allocation12] sm:$0xff]
    %v457 = vsel %vm273, %v438, %v456
    %458 = vst [vmem:[#allocation12] sm:$0xff] %v457
    %v459 = vld [vmem:[#allocation12 + $0x8] sm:$0xff]
    %v460 = vsel %vm273, %v454, %v459
    %461 = vst [vmem:[#allocation12 + $0x8] sm:$0xff] %v460
    %vm462 = vcmp.eq.f32.partialorder %v35, 2.0
    %vm463 = vcmp.eq.f32.partialorder %v36, 2.0
    %v464 = vsel %vm462, 1, 0
    %v465 = vsel %vm463, 1, 0
    %v467 = vunpack.c.l.s4 286326784
    %v468 = vunpack.c.0.s8 %v467
    %v469 = vperm.slane %v464, %v468
    %v471 = vunpack.c.l.s4 858989090
    %v472 = vunpack.c.0.s8 %v471
    %v473 = vperm.slane %v464, %v472
    %v475 = vunpack.c.l.s4 1431651396
    %v476 = vunpack.c.0.s8 %v475
    %v477 = vperm.slane %v464, %v476
    %v479 = vunpack.c.l.s4 2004313702
    %v480 = vunpack.c.0.s8 %v479
    %v481 = vperm.slane %v464, %v480
    %v483 = vunpack.c.l.s4 286326784
    %v484 = vunpack.c.0.s8 %v483
    %v485 = vperm.slane %v465, %v484
    %v487 = vunpack.c.l.s4 858989090
    %v488 = vunpack.c.0.s8 %v487
    %v489 = vperm.slane %v465, %v488
    %v491 = vunpack.c.l.s4 1431651396
    %v492 = vunpack.c.0.s8 %v491
    %v493 = vperm.slane %v465, %v492
    %v495 = vunpack.c.l.s4 2004313702
    %v496 = vunpack.c.0.s8 %v495
    %v497 = vperm.slane %v465, %v496
    %vm498 = vcmp.ne.s32.totalorder %v469, 0
    %vm499 = vcmp.ne.s32.totalorder %v473, 0
    %vm500 = vcmp.ne.s32.totalorder %v477, 0
    %vm501 = vcmp.ne.s32.totalorder %v481, 0
    %vm502 = vcmp.ne.s32.totalorder %v485, 0
    %vm503 = vcmp.ne.s32.totalorder %v489, 0
    %vm504 = vcmp.ne.s32.totalorder %v493, 0
    %vm505 = vcmp.ne.s32.totalorder %v497, 0
    %v506 = vsel %vm498, 1, 0
    %v507 = vsel %vm499, 1, 0
    %v508 = vsel %vm500, 1, 0
    %v509 = vsel %vm501, 1, 0
    %v510 = vsel %vm502, 1, 0
    %v511 = vsel %vm503, 1, 0
    %v512 = vsel %vm504, 1, 0
    %v513 = vsel %vm505, 1, 0
    %v514 = vpack.c.b16 %v507, %v506
    %v515 = vpack.c.b16 %v509, %v508
    %v516 = vpack.c.b8 %v515, %v514
    %v517 = vpack.c.b16 %v511, %v510
    %v518 = vpack.c.b16 %v513, %v512
    %v519 = vpack.c.b8 %v518, %v517
    %vm520 = vnez %v516
    %vm521 = vnez %v519
    %v522 = vsel %vm520, 16843009, 0
    %v523 = vsel %vm521, 16843009, 0
    %525 = vst [vmem:[#allocation1] ss:$9 sm:$0xff] %v522
    %v526 = vld [vmem:[#allocation1] sm:$0xff]
    %v528 = vld [vmem:[#allocation1 + $0x9] sm:$0xff]
    %v530 = vld [vmem:[#allocation1 + $0x12] sm:$0xff]
    %v532 = vld [vmem:[#allocation1 + $0x1b] sm:$0xff]
    %v534 = vld [vmem:[#allocation1 + $0x24] sm:$0xff]
    %v536 = vld [vmem:[#allocation1 + $0x2d] sm:$0xff]
    %v538 = vld [vmem:[#allocation1 + $0x36] sm:$0xff]
    %v540 = vld [vmem:[#allocation1 + $0x3f] sm:$0xff]
    %543 = vst [vmem:[#allocation1] ss:$9 sm:$0xff] %v523
    %v544 = vld [vmem:[#allocation1] sm:$0xff]
    %v546 = vld [vmem:[#allocation1 + $0x9] sm:$0xff]
    %v548 = vld [vmem:[#allocation1 + $0x12] sm:$0xff]
    %v550 = vld [vmem:[#allocation1 + $0x1b] sm:$0xff]
    %v552 = vld [vmem:[#allocation1 + $0x24] sm:$0xff]
    %v554 = vld [vmem:[#allocation1 + $0x2d] sm:$0xff]
    %v556 = vld [vmem:[#allocation1 + $0x36] sm:$0xff]
    %v558 = vld [vmem:[#allocation1 + $0x3f] sm:$0xff]
    %vm560 = vnez %v526
    %vm561 = vnez %v528
    %vm562 = vnez %v530
    %vm563 = vnez %v532
    %vm564 = vnez %v534
    %vm565 = vnez %v536
    %vm566 = vnez %v538
    %vm567 = vnez %v540
    %vm568 = vnez %v544
    %vm569 = vnez %v546
    %vm570 = vnez %v548
    %vm571 = vnez %v550
    %vm572 = vnez %v552
    %vm573 = vnez %v554
    %vm574 = vnez %v556
    %vm575 = vnez %v558
    %v576 = vsel %vm560, 16843009, 0
    %v577 = vsel %vm561, 16843009, 0
    %v578 = vsel %vm562, 16843009, 0
    %v579 = vsel %vm563, 16843009, 0
    %v580 = vsel %vm564, 16843009, 0
    %v581 = vsel %vm565, 16843009, 0
    %v582 = vsel %vm566, 16843009, 0
    %v583 = vsel %vm567, 16843009, 0
    %v584 = vsel %vm568, 16843009, 0
    %v585 = vsel %vm569, 16843009, 0
    %v586 = vsel %vm570, 16843009, 0
    %v587 = vsel %vm571, 16843009, 0
    %v588 = vsel %vm572, 16843009, 0
    %v589 = vsel %vm573, 16843009, 0
    %v590 = vsel %vm574, 16843009, 0
    %v591 = vsel %vm575, 16843009, 0
    %v592 = vrot.slane %v577, 7
    %v593 = vrot.slane %v578, 6
    %v594 = vrot.slane %v579, 5
    %v595 = vrot.slane %v580, 4
    %v596 = vrot.slane %v581, 3
    %v597 = vrot.slane %v582, 2
    %v598 = vrot.slane %v583, 1
    %v599 = vrot.slane %v585, 7
    %v600 = vrot.slane %v586, 6
    %v601 = vrot.slane %v587, 5
    %v602 = vrot.slane %v588, 4
    %v603 = vrot.slane %v589, 3
    %v604 = vrot.slane %v590, 2
    %v605 = vrot.slane %v591, 1
    %v608 = vsel %vm204, %v576, %v592
    %v611 = vsel %vm208, %v593, %v594
    %v612 = vsel %vm212, %v608, %v611
    %v615 = vsel %vm214, %v595, %v596
    %v618 = vsel %vm218, %v597, %v598
    %v619 = vsel %vm222, %v615, %v618
    %v620 = vsel %vm224, %v612, %v619
    %v624 = vsel %vm204, %v584, %v599
    %v627 = vsel %vm208, %v600, %v601
    %v628 = vsel %vm212, %v624, %v627
    %v631 = vsel %vm214, %v602, %v603
    %v634 = vsel %vm218, %v604, %v605
    %v635 = vsel %vm222, %v631, %v634
    %v636 = vsel %vm224, %v628, %v635
    %v638 = vld [vmem:[#allocation14] sm:$0xff]
    %v639 = vsel %vm273, %v620, %v638
    %640 = vst [vmem:[#allocation14] sm:$0xff] %v639
    %v641 = vld [vmem:[#allocation14 + $0x8] sm:$0xff]
    %v642 = vsel %vm273, %v636, %v641
    %643 = vst [vmem:[#allocation14 + $0x8] sm:$0xff] %v642
    // Predicated region
    $region10: #{tpu_custom_call.1} parent=1 // pred_check
      _
    $region11: #{tpu_custom_call.1} parent=1 // pred_check_branch
      %645 = sbr.rel (0) target = $region13
    $region12: #{tpu_custom_call.1} parent=1 // pred_region
      %647 = vsyncadd [#allocation4], 0
      %s649 = sshll.u32 [#allocation5], 4
      %s650 = int_to_ptr.vmem [resolvable:$true] %s649
      %s651 = sshll.u32 %s1, 4
      %s652 = int_to_ptr.hbm [resolvable:$true] %s651
      %654 = dma.vmem_to_hbm [thread:$0]  %s650, 256, %s652, [#allocation4]
    $region13: #{tpu_custom_call.1} parent=1 // pred_fallthru
      _
    // Predicated region
    $region14: #{tpu_custom_call.1} parent=1 // pred_check
      _
    $region15: #{tpu_custom_call.1} parent=1 // pred_check_branch
      %656 = sbr.rel (0) target = $region17
    $region16: #{tpu_custom_call.1} parent=1 // pred_region
      %658 = vsyncadd [#allocation7], 0
      %s660 = sshll.u32 [#allocation6], 4
      %s661 = int_to_ptr.vmem [resolvable:$true] %s660
      %s662 = sshll.u32 %s2, 4
      %s663 = int_to_ptr.hbm [resolvable:$true] %s662
      %665 = dma.vmem_to_hbm [thread:$0]  %s661, 256, %s663, [#allocation7]
    $region17: #{tpu_custom_call.1} parent=1 // pred_fallthru
      _
    // Predicated region
    $region18: #{tpu_custom_call.1} parent=1 // pred_check
      _
    $region19: #{tpu_custom_call.1} parent=1 // pred_check_branch
      %667 = sbr.rel (0) target = $region21
    $region20: #{tpu_custom_call.1} parent=1 // pred_region
      %669 = vsyncadd [#allocation7], 0
      %s671 = sshll.u32 [#allocation8], 4
      %s672 = int_to_ptr.vmem [resolvable:$true] %s671
      %s673 = sshll.u32 %s3, 4
      %s674 = int_to_ptr.hbm [resolvable:$true] %s673
      %676 = dma.vmem_to_hbm [thread:$0]  %s672, 256, %s674, [#allocation7]
    $region21: #{tpu_custom_call.1} parent=1 // pred_fallthru
      _
    // Predicated region
    $region22: #{tpu_custom_call.1} parent=1 // pred_check
      _
    $region23: #{tpu_custom_call.1} parent=1 // pred_check_branch
      %678 = sbr.rel (0) target = $region25
    $region24: #{tpu_custom_call.1} parent=1 // pred_region
      %680 = vsyncadd [#allocation10], 0
      %s682 = sshll.u32 [#allocation9], 4
      %s683 = int_to_ptr.vmem [resolvable:$true] %s682
      %s684 = sshll.u32 %s4, 4
      %s685 = int_to_ptr.hbm [resolvable:$true] %s684
      %687 = dma.vmem_to_hbm [thread:$0]  %s683, 256, %s685, [#allocation10]
    $region25: #{tpu_custom_call.1} parent=1 // pred_fallthru
      _
    // Predicated region
    $region26: #{tpu_custom_call.1} parent=1 // pred_check
      _
    $region27: #{tpu_custom_call.1} parent=1 // pred_check_branch
      %689 = sbr.rel (0) target = $region29
    $region28: #{tpu_custom_call.1} parent=1 // pred_region
      %691 = vsyncadd [#allocation10], 0
      %s693 = sshll.u32 [#allocation11], 4
      %s694 = int_to_ptr.vmem [resolvable:$true] %s693
      %s695 = sshll.u32 %s5, 4
      %s696 = int_to_ptr.hbm [resolvable:$true] %s695
      %698 = dma.vmem_to_hbm [thread:$0]  %s694, 256, %s696, [#allocation10]
    $region29: #{tpu_custom_call.1} parent=1 // pred_fallthru
      _
    // Predicated region
    $region30: #{tpu_custom_call.1} parent=1 // pred_check
      _
    $region31: #{tpu_custom_call.1} parent=1 // pred_check_branch
      %700 = sbr.rel (0) target = $region33
    $region32: #{tpu_custom_call.1} parent=1 // pred_region
      %702 = vsyncadd [#allocation13], 0
      %s704 = sshll.u32 [#allocation12], 4
      %s705 = int_to_ptr.vmem [resolvable:$true] %s704
      %s706 = sshll.u32 %s6, 4
      %s707 = int_to_ptr.hbm [resolvable:$true] %s706
      %709 = dma.vmem_to_hbm [thread:$0]  %s705, 256, %s707, [#allocation13]
    $region33: #{tpu_custom_call.1} parent=1 // pred_fallthru
      _
    // Predicated region
    $region34: #{tpu_custom_call.1} parent=1 // pred_check
      _
    $region35: #{tpu_custom_call.1} parent=1 // pred_check_branch
      %711 = sbr.rel (0) target = $region37
    $region36: #{tpu_custom_call.1} parent=1 // pred_region
      %713 = vsyncadd [#allocation13], 0
      %s715 = sshll.u32 [#allocation14], 4
      %s716 = int_to_ptr.vmem [resolvable:$true] %s715
      %s717 = sshll.u32 %s7, 4
      %s718 = int_to_ptr.hbm [resolvable:$true] %s717
      %720 = dma.vmem_to_hbm [thread:$0]  %s716, 256, %s718, [#allocation13]
    $region37: #{tpu_custom_call.1} parent=1 // pred_fallthru
      _
    // Predicated region
    $region38: #{tpu_custom_call.1} parent=1 // pred_check
      _
    $region39: #{tpu_custom_call.1} parent=1 // pred_check_branch
      %722 = sbr.rel (0) target = $region41
    $region40: #{tpu_custom_call.1} parent=1 // pred_region
      %724 = dma.done [#allocation4], 256
    $region41: #{tpu_custom_call.1} parent=1 // pred_fallthru
      _
    // Predicated region
    $region42: #{tpu_custom_call.1} parent=1 // pred_check
      _
    $region43: #{tpu_custom_call.1} parent=1 // pred_check_branch
      %726 = sbr.rel (0) target = $region45
    $region44: #{tpu_custom_call.1} parent=1 // pred_region
      %728 = dma.done [#allocation7], 256
    $region45: #{tpu_custom_call.1} parent=1 // pred_fallthru
      _
    // Predicated region
    $region46: #{tpu_custom_call.1} parent=1 // pred_check
      _
    $region47: #{tpu_custom_call.1} parent=1 // pred_check_branch
      %730 = sbr.rel (0) target = $region49
    $region48: #{tpu_custom_call.1} parent=1 // pred_region
      %732 = dma.done [#allocation7], 256
    $region49: #{tpu_custom_call.1} parent=1 // pred_fallthru
      _
    // Predicated region
    $region50: #{tpu_custom_call.1} parent=1 // pred_check
      _
    $region51: #{tpu_custom_call.1} parent=1 // pred_check_branch
      %734 = sbr.rel (0) target = $region53
    $region52: #{tpu_custom_call.1} parent=1 // pred_region
      %736 = dma.done [#allocation10], 256
    $region53: #{tpu_custom_call.1} parent=1 // pred_fallthru
      _
    // Predicated region
    $region54: #{tpu_custom_call.1} parent=1 // pred_check
      _
    $region55: #{tpu_custom_call.1} parent=1 // pred_check_branch
      %738 = sbr.rel (0) target = $region57
    $region56: #{tpu_custom_call.1} parent=1 // pred_region
      %740 = dma.done [#allocation10], 256
    $region57: #{tpu_custom_call.1} parent=1 // pred_fallthru
      _
    // Predicated region
    $region58: #{tpu_custom_call.1} parent=1 // pred_check
      _
    $region59: #{tpu_custom_call.1} parent=1 // pred_check_branch
      %742 = sbr.rel (0) target = $region61
    $region60: #{tpu_custom_call.1} parent=1 // pred_region
      %744 = dma.done [#allocation13], 256
    $region61: #{tpu_custom_call.1} parent=1 // pred_fallthru
      _
    // Predicated region
    $region62: #{tpu_custom_call.1} parent=1 // pred_check
      _
    $region63: #{tpu_custom_call.1} parent=1 // pred_check_branch
      %746 = sbr.rel (0) target = $region65
    $region64: #{tpu_custom_call.1} parent=1 // pred_region
      %748 = dma.done [#allocation13], 256
    $region65: #{tpu_custom_call.1} parent=1 // pred_fallthru
      _
    %749 = vsyncpa [#allocation3], 1
    %750 = vsyncpa [#allocation4], 1
    %751 = vsyncpa [#allocation7], 1
    %752 = vsyncpa [#allocation10], 1
    %753 = vsyncpa [#allocation13], 1

</llo_original>
